<compile_context>
chip_gen: v6e
topology: v6e:2x2x1
jax: 0.10.0
libtpu: 0.0.40
codegen_flags: <defaults>
</compile_context>

<pallas_src>
import functools

import jax
import jax.numpy as jnp
from jax.experimental import pallas as pl
from jax.experimental.pallas import tpu as pltpu

# Double-buffered working set kept under ~48 MiB: safe on v7x (64 MiB VMEM per
# TensorCore) and leaves headroom for Mosaic internal scratch; trivially fits
# v5e/v6e (128 MiB physical VMEM).
_VMEM_BUDGET_BYTES = 48 << 20


def _cdiv(a, b):
    return -(-a // b)


def _round_up(x, m):
    return _cdiv(x, m) * m


def _sublane_granule(dtype):
    # Rows per native VMEM tile on the second-minor axis: f32 -> 8, bf16 -> 16.
    return max(8, 32 // jnp.dtype(dtype).itemsize)


def _pick_block_c(n_cls, tile_rows, ctx_dim, dtype,
                  target_tile_bytes=8 << 20,
                  working_set_budget=_VMEM_BUDGET_BYTES,
                  buffers_per_tile=4):
    """Number of classes per grid step.

    Targets ~8 MiB output tiles (small tiles only reach 30-60% of HBM roofline
    and pay ~0.35us/step overhead) while keeping the double-buffered working
    set (~buffers_per_tile x output tile) under the v7x-safe VMEM budget.
    No divisor constraint: the grid uses cdiv and Pallas masks the tail block.
    Prefers an even number of grid steps so v7x's two TensorCores stay evenly
    loaded under dimension_semantics=("parallel",).
    """
    itemsize = jnp.dtype(dtype).itemsize
    per_class_bytes = tile_rows * ctx_dim * itemsize
    tile_budget = min(target_tile_bytes, working_set_budget // buffers_per_tile)
    block_c = int(max(1, min(n_cls, tile_budget // max(per_class_bytes, 1))))
    if block_c >= n_cls:
        return n_cls
    grid = _cdiv(n_cls, block_c)
    if grid > 1 and grid % 2 == 1:       # v7x: avoid one TC doing an extra step
        grid += 1
        block_c = _cdiv(n_cls, grid)
    return int(block_c)


# ----------------------------------------------------------------------------
# Path 1: in-place, aliased head-window kernel (minimal HBM traffic).
# ----------------------------------------------------------------------------
def _ctx_overwrite_kernel(ctx_ref, head_in_ref, head_out_ref, *, n_ctx):
    # ctx_ref      : (n_ctx, D)      shared learnable context (same every step)
    # head_in_ref  : (C, HEAD, D)    aliased head window of the token embedding
    # head_out_ref : (C, HEAD, D)    same HBM region (input_output_aliases)
    c, _, d = head_out_ref.shape
    # Preserve row 0 (SOS) and rows [1+n_ctx : HEAD) (first suffix rows) ...
    head_out_ref[...] = head_in_ref[...]
    # ... then overwrite the ctx slots with the broadcast learnable context.
    head_out_ref[:, 1:1 + n_ctx, :] = jnp.broadcast_to(
        ctx_ref[...][None, :, :], (c, n_ctx, d))


@functools.partial(jax.jit, static_argnames=("block_c",), donate_argnums=(1,))
def prompt_learner_forward_inplace(ctx, token_embedding, *, block_c=None):
    """prompts = token_embedding with rows [1 : 1+n_ctx) replaced by ctx.

    ctx:             (n_ctx, ctx_dim)
    token_embedding: (n_cls, seq_len, ctx_dim)   (donated; output aliases it)
    returns:         (n_cls, seq_len, ctx_dim)
    """
    n_ctx, ctx_dim = ctx.shape
    n_cls, seq_len, emb_dim = token_embedding.shape
    assert emb_dim == ctx_dim
    assert token_embedding.dtype == ctx.dtype
    dtype = ctx.dtype
    itemsize = jnp.dtype(dtype).itemsize

    # Sublane-aligned head window containing row 0 (kept) + the n_ctx ctx rows.
    head = min(seq_len, _round_up(1 + n_ctx, _sublane_granule(dtype)))

    if block_c is None:
        block_c = _pick_block_c(n_cls, head, ctx_dim, dtype)
    grid = int(_cdiv(n_cls, block_c))

    kernel = functools.partial(_ctx_overwrite_kernel, n_ctx=n_ctx)
    bytes_accessed = (2 * n_cls * head + n_ctx) * ctx_dim * itemsize

    return pl.pallas_call(
        kernel,
        out_shape=jax.ShapeDtypeStruct((n_cls, seq_len, ctx_dim), dtype),
        grid_spec=pltpu.PrefetchScalarGridSpec(
            num_scalar_prefetch=0,
            grid=(grid,),
            in_specs=[
                # shared ctx block (same block every step -> loaded once)
                pl.BlockSpec((n_ctx, ctx_dim), lambda i: (0, 0)),
                # head window of the aliased embedding for this class block
                pl.BlockSpec((block_c, head, ctx_dim), lambda i: (i, 0, 0)),
            ],
            # Only the head window is ever written; rows [head:seq) are never
            # covered by the grid and keep the aliased input's values.
            out_specs=pl.BlockSpec((block_c, head, ctx_dim), lambda i: (i, 0, 0)),
        ),
        input_output_aliases={1: 0},     # output buffer IS token_embedding
        compiler_params=pltpu.CompilerParams(
            dimension_semantics=("parallel",),
            vmem_limit_bytes=_VMEM_BUDGET_BYTES,
        ),
        cost_estimate=pl.CostEstimate(
            flops=0, transcendentals=0, bytes_accessed=int(bytes_accessed)),
    )(ctx, token_embedding)


# ----------------------------------------------------------------------------
# Path 2: concat from the module's token_prefix / token_suffix buffers.
# ----------------------------------------------------------------------------
def _prompt_cat_kernel(ctx_ref, prefix_ref, suffix_ref, out_ref, *, n_ctx):
    # ctx_ref    : (n_ctx, D)       shared block (same for every grid step)
    # prefix_ref : (C, 1, D)        per-class SOS embeddings for this block
    # suffix_ref : (C, S_suf, D)    per-class classname + EOS embeddings
    # out_ref    : (C, S, D)        S = 1 + n_ctx + S_suf
    c, _, d = out_ref.shape
    out_ref[:, 0:1, :] = prefix_ref[...]                          # SOS / prefix
    out_ref[:, 1:1 + n_ctx, :] = jnp.broadcast_to(                # learnable ctx
        ctx_ref[...][None, :, :], (c, n_ctx, d))
    out_ref[:, 1 + n_ctx:, :] = suffix_ref[...]                   # classname+EOS


def prompt_learner_forward(ctx, token_prefix, token_suffix, *, block_c=None):
    """Pallas implementation of PromptLearner.forward() from its buffers.

    ctx:          (n_ctx, ctx_dim)
    token_prefix: (n_cls, 1, ctx_dim)
    token_suffix: (n_cls, seq_len - 1 - n_ctx, ctx_dim)
    returns:      (n_cls, seq_len, ctx_dim)
    """
    n_ctx, ctx_dim = ctx.shape
    n_cls = token_prefix.shape[0]
    s_suf = token_suffix.shape[1]
    seq_len = 1 + n_ctx + s_suf
    dtype = ctx.dtype
    itemsize = jnp.dtype(dtype).itemsize

    if block_c is None:
        block_c = _pick_block_c(n_cls, seq_len, ctx_dim, dtype)
    grid = int(_cdiv(n_cls, block_c))

    kernel = functools.partial(_prompt_cat_kernel, n_ctx=n_ctx)
    bytes_accessed = (2 * seq_len - n_ctx) * n_cls * ctx_dim * itemsize

    return pl.pallas_call(
        kernel,
        out_shape=jax.ShapeDtypeStruct((n_cls, seq_len, ctx_dim), dtype),
        grid_spec=pltpu.PrefetchScalarGridSpec(
            num_scalar_prefetch=0,
            grid=(grid,),
            in_specs=[
                pl.BlockSpec((n_ctx, ctx_dim), lambda i: (0, 0)),
                pl.BlockSpec((block_c, 1, ctx_dim), lambda i: (i, 0, 0)),
                pl.BlockSpec((block_c, s_suf, ctx_dim), lambda i: (i, 0, 0)),
            ],
            out_specs=pl.BlockSpec((block_c, seq_len, ctx_dim),
                                   lambda i: (i, 0, 0)),
        ),
        compiler_params=pltpu.CompilerParams(
            dimension_semantics=("parallel",),
            vmem_limit_bytes=_VMEM_BUDGET_BYTES,
        ),
        cost_estimate=pl.CostEstimate(
            flops=0, transcendentals=0, bytes_accessed=int(bytes_accessed)),
    )(ctx, token_prefix, token_suffix)


if __name__ == "__main__":
    # Small, module-consistent shapes (real CLIP: seq_len=77, ctx_dim=512/768).
    n_cls = 8        # number of class names
    n_ctx = 4        # number of learnable context tokens
    ctx_dim = 128    # CLIP ln_final width (lane-friendly multiple of 128)
    seq_len = 16     # tokenized prompt length (CLIP uses 77; small here)
    s_suf = seq_len - 1 - n_ctx

    key = jax.random.PRNGKey(0)
    k_ctx, k_emb = jax.random.split(key)

    # __init__: ctx_vectors ~ N(0, 0.02^2)
    ctx = (0.02 * jax.random.normal(k_ctx, (n_ctx, ctx_dim))).astype(jnp.float32)

    # __init__: token_embedding(tokenized_prompts) -> (n_cls, seq_len, ctx_dim).
    # Rows 1..1+n_ctx are the "X" placeholder embeddings forward() overwrites.
    embedding = jax.random.normal(
        k_emb, (n_cls, seq_len, ctx_dim)).astype(jnp.float32)
    token_prefix = embedding[:, :1, :]
    token_suffix = embedding[:, 1 + n_ctx:, :]

    # Pure-JAX reference (and all derived arrays) built BEFORE the in-place
    # kernels run, since those donate their embedding argument.
    ref = jnp.concatenate(
        [token_prefix,
         jnp.broadcast_to(ctx[None], (n_cls, n_ctx, ctx_dim)),
         token_suffix], axis=-2)

    ctx_bf = ctx.astype(jnp.bfloat16)
    emb_bf = embedding.astype(jnp.bfloat16)
    pre_bf = token_prefix.astype(jnp.bfloat16)
    suf_bf = token_suffix.astype(jnp.bfloat16)
    ref_bf = jnp.concatenate(
        [pre_bf, jnp.broadcast_to(ctx_bf[None], (n_cls, n_ctx, ctx_dim)), suf_bf],
        axis=-2)

    # --- Path 1: aliased in-place kernel (embedding buffers are donated). ---
    prompts = prompt_learner_forward_inplace(ctx, embedding)
    jax.block_until_ready(prompts)
    assert prompts.shape == (n_cls, seq_len, ctx_dim)
    assert bool(jnp.array_equal(prompts, ref)), "in-place f32 mismatch"

    prompts_bf = prompt_learner_forward_inplace(ctx_bf, emb_bf)
    jax.block_until_ready(prompts_bf)
    assert bool(jnp.array_equal(prompts_bf, ref_bf)), "in-place bf16 mismatch"

    # --- Path 2: concat from the module's registered prefix/suffix buffers. ---
    prompts2 = prompt_learner_forward(ctx, token_prefix, token_suffix)
    jax.block_until_ready(prompts2)
    assert prompts2.shape == (n_cls, seq_len, ctx_dim)
    assert bool(jnp.array_equal(prompts2, ref)), "concat f32 mismatch"

    prompts2_bf = prompt_learner_forward(ctx_bf, pre_bf, suf_bf)
    jax.block_until_ready(prompts2_bf)
    assert bool(jnp.array_equal(prompts2_bf, ref_bf)), "concat bf16 mismatch"

    print("KERNEL_OK")
</pallas_src>

<mosaic_0001>
module attributes {stable_mosaic.version = 11 : i64} {
  func.func @_ctx_overwrite_kernel(%arg0: i32, %arg1: memref<4x128xf32, #tpu.memory_space<vmem>>, %arg2: memref<8x8x128xf32, #tpu.memory_space<vmem>>, %arg3: memref<8x8x128xf32, #tpu.memory_space<vmem>>) attributes {dimension_semantics = [#tpu.dimension_semantics<parallel>], iteration_bounds = array<i64: 1>, scalar_prefetch = 0 : i64, scratch_operands = 0 : i64, tpu.core_type = #tpu.core_type<tc>, window_params = [{pipeline_mode = #tpu.pipeline_mode<synchronous>, transform_indices = @transform_0, window_bounds = array<i64: 4, 128>}, {transform_indices = @transform_1, window_bounds = array<i64: 8, 8, 128>}, {transform_indices = @transform_2, window_bounds = array<i64: 8, 8, 128>}]} {
    %c0 = arith.constant 0 : index
    %c0_0 = arith.constant 0 : index
    %c0_1 = arith.constant 0 : index
    %0 = vector.load %arg2[%c0, %c0_0, %c0_1] : memref<8x8x128xf32, #tpu.memory_space<vmem>>, vector<8x8x128xf32>
    %c0_2 = arith.constant 0 : index
    %c0_3 = arith.constant 0 : index
    %c0_4 = arith.constant 0 : index
    %1 = vector.load %arg3[%c0_2, %c0_3, %c0_4] : memref<8x8x128xf32, #tpu.memory_space<vmem>>, vector<8x8x128xf32>
    tpu.vector_store %arg3[%c0_2, %c0_3, %c0_4], %0 {strides = array<i32>} : memref<8x8x128xf32, #tpu.memory_space<vmem>>, vector<8x8x128xf32>,
    %c0_5 = arith.constant 0 : index
    %c0_6 = arith.constant 0 : index
    %2 = vector.load %arg1[%c0_5, %c0_6] : memref<4x128xf32, #tpu.memory_space<vmem>>, vector<4x128xf32>
    %3 = vector.shape_cast %2 : vector<4x128xf32> to vector<1x4x128xf32>
    %4 = vector.shape_cast %3 : vector<1x4x128xf32> to vector<1x4x128xf32>
    %5 = vector.broadcast %4 : vector<1x4x128xf32> to vector<8x4x128xf32>
    %c0_7 = arith.constant 0 : index
    %c1 = arith.constant 1 : index
    %c0_8 = arith.constant 0 : index
    %6 = vector.load %arg3[%c0_7, %c1, %c0_8] : memref<8x8x128xf32, #tpu.memory_space<vmem>>, vector<8x4x128xf32>
    tpu.vector_store %arg3[%c0_7, %c1, %c0_8], %5 {strides = array<i32>} : memref<8x8x128xf32, #tpu.memory_space<vmem>>, vector<8x4x128xf32>,
    return
  }
  func.func @transform_0(%arg0: i32) -> (i32, i32) {
    %c0_i32 = arith.constant 0 : i32
    %c0_i32_0 = arith.constant 0 : i32
    %c0_i32_1 = arith.constant 0 : i32
    return %c0_i32, %c0_i32_0 : i32, i32
  }
  func.func @transform_1(%arg0: i32) -> (i32, i32, i32) {
    %c0_i32 = arith.constant 0 : i32
    %c0_i32_0 = arith.constant 0 : i32
    %c0_i32_1 = arith.constant 0 : i32
    return %arg0, %c0_i32, %c0_i32_0 : i32, i32, i32
  }
  func.func @transform_2(%arg0: i32) -> (i32, i32, i32) {
    %c0_i32 = arith.constant 0 : i32
    %c0_i32_0 = arith.constant 0 : i32
    %c0_i32_1 = arith.constant 0 : i32
    return %arg0, %c0_i32, %c0_i32_0 : i32, i32, i32
  }
}

</mosaic_0001>

<llo_original>
// kernel: prompt_learner_forward_inplace.1
$region0: #{prompt_learner_forward_inplace.1}
  #allocation0 [shape = 'u32[]', space=smem, size = 0x4, offset = 0x4, fixed_abs, tag = 'smem constant byte address 0x4 - core index']
  #allocation1 [shape = 'u32[144,128]{1,0:T(1,128)}', space=vmem, size = 0x12000, scoped, tag = 'internal scratch']
  %s0 = inlined_call_operand.hbm [shape: f32[4,128], index: 0, kind: input, shape index: {}]
  %s1 = inlined_call_operand.hbm [shape: f32[8,16,128], index: 1, kind: input, shape index: {}, may-alias: {1,2}]
  %s2 = inlined_call_operand.hbm [shape: f32[8,16,128], index: 2, kind: output, shape index: {}, may-alias: {1,2}]
  %s3 = sld [smem:[#allocation0]]
  $region26: #{prompt_learner_forward_inplace.1} parent=0
    _
  %s5 = ssub.s32 1, %s3
  %s6 = scalar_select 0, %s5, %s3
  $region1: #{prompt_learner_forward_inplace.1} parent=0
    #allocation2 [shape = 'u8[2048]{0}', space=vmem, size = 0x800, scoped, tag = 'input window, operand 0, single buffered']
    #allocation3 [shape = 's32[1]{0}', space=sflag, size = 0x4, scoped, tag = 'scoped memory for prompt_learner_forward_inplace.1']
    #allocation4 [shape = 's32[1]{0}', space=sflag, size = 0x4, scoped, tag = 'scoped memory for prompt_learner_forward_inplace.1']
    #allocation5 [shape = 'u8[32768]{0}', space=vmem, size = 0x8000, scoped, tag = 'input window, operand 1, single buffered']
    #allocation6 [shape = 's32[1]{0}', space=sflag, size = 0x4, scoped, tag = 'scoped memory for prompt_learner_forward_inplace.1']
    #allocation7 [shape = 'u8[32768]{0}', space=vmem, size = 0x8000, scoped, tag = 'output window, operand 0, single buffered']
    %7 = vsyncpa [#allocation3], 0
    %8 = vsyncpa [#allocation6], 0
    %9 = vsyncpa [#allocation4], 0
    // Predicated region
    $region2: #{prompt_learner_forward_inplace.1} parent=1 // pred_check
      _
    $region3: #{prompt_learner_forward_inplace.1} parent=1 // pred_check_branch
      %11 = sbr.rel (0) target = $region5
    $region4: #{prompt_learner_forward_inplace.1} parent=1 // pred_region
      %s13 = ssub.s32 64, 64
      %14 = vsyncadd [#allocation3], %s13
      %s16 = sshll.u32 [#allocation2], 4
      %s17 = int_to_ptr.vmem [resolvable:$true] %s16
      %19 = dma.hbm_to_vmem [thread:$0]  %s0, 64, %s17, [#allocation3]
    $region5: #{prompt_learner_forward_inplace.1} parent=1 // pred_fallthru
      _
    // Predicated region
    $region6: #{prompt_learner_forward_inplace.1} parent=1 // pred_check
      _
    $region7: #{prompt_learner_forward_inplace.1} parent=1 // pred_check_branch
      %21 = sbr.rel (0) target = $region9
    $region8: #{prompt_learner_forward_inplace.1} parent=1 // pred_region
      %s23 = ssub.s32 1024, 1024
      %24 = vsyncadd [#allocation6], %s23
      %s25 = sshll.u32 [#allocation5], 4
      %s26 = int_to_ptr.vmem [resolvable:$true] %s25
      %31 = dma.hbm_to_vmem [thread:$0]  %s1, 1024, %s26, [#allocation6], 256, 128, 8
    $region9: #{prompt_learner_forward_inplace.1} parent=1 // pred_fallthru
      _
    // Predicated region
    $region10: #{prompt_learner_forward_inplace.1} parent=1 // pred_check
      _
    $region11: #{prompt_learner_forward_inplace.1} parent=1 // pred_check_branch
      %33 = sbr.rel (0) target = $region13
    $region12: #{prompt_learner_forward_inplace.1} parent=1 // pred_region
      %34 = dma.done [#allocation3], 64
    $region13: #{prompt_learner_forward_inplace.1} parent=1 // pred_fallthru
      _
    // Predicated region
    $region14: #{prompt_learner_forward_inplace.1} parent=1 // pred_check
      _
    $region15: #{prompt_learner_forward_inplace.1} parent=1 // pred_check_branch
      %36 = sbr.rel (0) target = $region17
    $region16: #{prompt_learner_forward_inplace.1} parent=1 // pred_region
      %37 = dma.done [#allocation6], 1024
    $region17: #{prompt_learner_forward_inplace.1} parent=1 // pred_fallthru
      _
    %v38 = vld [vmem:[#allocation5] sm:$0xff]
    %v39 = vld [vmem:[#allocation5 + $0x8] sm:$0xff]
    %v40 = vld [vmem:[#allocation5 + $0x10] sm:$0xff]
    %v41 = vld [vmem:[#allocation5 + $0x18] sm:$0xff]
    %v42 = vld [vmem:[#allocation5 + $0x20] sm:$0xff]
    %v43 = vld [vmem:[#allocation5 + $0x28] sm:$0xff]
    %v44 = vld [vmem:[#allocation5 + $0x30] sm:$0xff]
    %v45 = vld [vmem:[#allocation5 + $0x38] sm:$0xff]
    %46 = vst [vmem:[#allocation7] sm:$0xff] %v38
    %47 = vst [vmem:[#allocation7 + $0x8] sm:$0xff] %v39
    %48 = vst [vmem:[#allocation7 + $0x10] sm:$0xff] %v40
    %49 = vst [vmem:[#allocation7 + $0x18] sm:$0xff] %v41
    %50 = vst [vmem:[#allocation7 + $0x20] sm:$0xff] %v42
    %51 = vst [vmem:[#allocation7 + $0x28] sm:$0xff] %v43
    %52 = vst [vmem:[#allocation7 + $0x30] sm:$0xff] %v44
    %53 = vst [vmem:[#allocation7 + $0x38] sm:$0xff] %v45
    %v54 = vld [vmem:[#allocation2] sm:$0xf]
    %55 = vst [vmem:[#allocation7 + $0x1] sm:$0xf] %v54
    %56 = vst [vmem:[#allocation7 + $0x9] sm:$0xf] %v54
    %57 = vst [vmem:[#allocation7 + $0x11] sm:$0xf] %v54
    %58 = vst [vmem:[#allocation7 + $0x19] sm:$0xf] %v54
    %59 = vst [vmem:[#allocation7 + $0x21] sm:$0xf] %v54
    %60 = vst [vmem:[#allocation7 + $0x29] sm:$0xf] %v54
    %61 = vst [vmem:[#allocation7 + $0x31] sm:$0xf] %v54
    %62 = vst [vmem:[#allocation7 + $0x39] sm:$0xf] %v54
    // Predicated region
    $region18: #{prompt_learner_forward_inplace.1} parent=1 // pred_check
      _
    $region19: #{prompt_learner_forward_inplace.1} parent=1 // pred_check_branch
      %64 = sbr.rel (0) target = $region21
    $region20: #{prompt_learner_forward_inplace.1} parent=1 // pred_region
      %s66 = ssub.s32 1024, 1024
      %67 = vsyncadd [#allocation4], %s66
      %s68 = sshll.u32 [#allocation7], 4
      %s69 = int_to_ptr.vmem [resolvable:$true] %s68
      %74 = dma.vmem_to_hbm [thread:$0]  %s69, 1024, %s2, [#allocation4], 128, 256, 8
    $region21: #{prompt_learner_forward_inplace.1} parent=1 // pred_fallthru
      _
    // Predicated region
    $region22: #{prompt_learner_forward_inplace.1} parent=1 // pred_check
      _
    $region23: #{prompt_learner_forward_inplace.1} parent=1 // pred_check_branch
      %76 = sbr.rel (0) target = $region25
    $region24: #{prompt_learner_forward_inplace.1} parent=1 // pred_region
      %77 = dma.done [#allocation4], 1024
    $region25: #{prompt_learner_forward_inplace.1} parent=1 // pred_fallthru
      _
    %78 = vsyncpa [#allocation3], 1
    %79 = vsyncpa [#allocation6], 1
    %80 = vsyncpa [#allocation4], 1

</llo_original>
